<compile_context>
chip_gen: v7x
topology: tpu7x:2x2x1
jax: 0.10.0
libtpu: 0.0.40
codegen_flags: <defaults>
</compile_context>

<pallas_src>
import functools

import jax
import jax.numpy as jnp
from jax.experimental import pallas as pl
from jax.experimental.pallas import tpu as pltpu

_LANES = 128
_TILE_BYTES = 4 << 20  # ~4 MiB per input tile; double-buffered ~8 MiB of VMEM


def _round_up(x, m):
    return ((x + m - 1) // m) * m


def _hinge_partial_sum_kernel(x_ref, out_ref, acc_ref, *, sign, n_rows,
                              n_blocks, tiles_per_core):
    """Accumulates sum(relu(1 + sign*x)) into a (8,128) lane-parallel acc."""
    c = pl.program_id(0)   # parallel (megacore) axis
    i = pl.program_id(1)   # reduction axis

    @pl.when(i == 0)
    def _init():
        acc_ref[...] = jnp.zeros_like(acc_ref)

    x = x_ref[...].astype(jnp.float32)                 # (tile_rows, 128)
    tile_rows = x.shape[0]
    margin = (1.0 + x) if sign > 0 else (1.0 - x)
    hinge = jnp.maximum(margin, 0.0)

    blk = c * tiles_per_core + i                       # logical block index

    # Hot path: fully-valid interior blocks need no masking.
    @pl.when(blk < n_blocks - 1)
    def _accum_full():
        acc_ref[...] += hinge.reshape(-1, 8, _LANES).sum(axis=0)

    # Tail path: last real block (may extend past the array) and clamped
    # duplicate blocks from uneven core splits -> mask rows >= n_rows.
    @pl.when(blk >= n_blocks - 1)
    def _accum_tail():
        row0 = blk * tile_rows
        rid = row0 + jax.lax.broadcasted_iota(jnp.int32, hinge.shape, 0)
        masked = jnp.where(rid < n_rows, hinge, 0.0)
        acc_ref[...] += masked.reshape(-1, 8, _LANES).sum(axis=0)

    @pl.when(i == pl.num_programs(1) - 1)
    def _finalize():
        out_ref[...] = acc_ref[...].reshape(1, 8, _LANES)


def _hinge_mean(x, *, sign, tile_bytes=_TILE_BYTES):
    """mean(relu(1 + sign*x)) over all elements of x (sign = +/-1)."""
    n = int(x.size)
    if n == 0:
        return jnp.float32(jnp.nan)   # matches torch.mean on an empty tensor

    itemsize = jnp.dtype(x.dtype).itemsize
    sub = max(8, 32 // itemsize)      # sublane multiple: 8/16/32 for 4/2/1 B

    flat = x.reshape(-1)
    rem = n % _LANES
    if rem:
        # Only ragged sizes pay this copy; the hinge-neutral pad value makes
        # padded elements contribute exactly 0 (relu(1 + sign*(-sign)) == 0).
        flat = jnp.pad(flat, (0, _LANES - rem), constant_values=float(-sign))
    rows = flat.size // _LANES
    x2d = flat.reshape(rows, _LANES)  # free view when rem == 0

    tile_cap = max(sub, (tile_bytes // (_LANES * itemsize)) // sub * sub)
    tile_rows = min(tile_cap, _round_up(rows, sub))

    n_blocks = pl.cdiv(rows, tile_rows)
    n_cores = min(2, n_blocks)        # v7x megacore; no-op on v5e/v6e
    tpc = pl.cdiv(n_blocks, n_cores)

    kernel = functools.partial(_hinge_partial_sum_kernel, sign=float(sign),
                               n_rows=rows, n_blocks=n_blocks,
                               tiles_per_core=tpc)

    partials = pl.pallas_call(
        kernel,
        out_shape=jax.ShapeDtypeStruct((n_cores, 8, _LANES), jnp.float32),
        grid_spec=pltpu.PrefetchScalarGridSpec(
            num_scalar_prefetch=0,
            grid=(n_cores, tpc),
            in_specs=[pl.BlockSpec(
                (tile_rows, _LANES),
                lambda c, i: (jnp.minimum(c * tpc + i, n_blocks - 1), 0))],
            out_specs=pl.BlockSpec((1, 8, _LANES), lambda c, i: (c, 0, 0)),
            scratch_shapes=[pltpu.VMEM((8, _LANES), jnp.float32)],
        ),
        compiler_params=pltpu.CompilerParams(
            dimension_semantics=("parallel", "arbitrary"),
            vmem_limit_bytes=32 << 20,
        ),
    )(x2d)

    # Single tiny cross-lane reduction + mean scaling in the wrapper.
    return jnp.sum(partials) / n


def hinge_loss(logits_real, logits_fake, *, tile_bytes=_TILE_BYTES):
    """d_loss = 0.5*(mean(relu(1-logits_real)) + mean(relu(1+logits_fake)))."""
    loss_real = _hinge_mean(logits_real, sign=-1.0, tile_bytes=tile_bytes)
    loss_fake = _hinge_mean(logits_fake, sign=+1.0, tile_bytes=tile_bytes)
    return 0.5 * (loss_real + loss_fake)


def _reference(logits_real, logits_fake):
    lr = logits_real.astype(jnp.float32)
    lf = logits_fake.astype(jnp.float32)
    loss_real = jnp.mean(jnp.maximum(1.0 - lr, 0.0))
    loss_fake = jnp.mean(jnp.maximum(1.0 + lf, 0.0))
    return 0.5 * (loss_real + loss_fake)


if __name__ == "__main__":
    key = jax.random.PRNGKey(0)
    k1, k2, k3, k4 = jax.random.split(key, 4)

    # Discriminator-style patch logits; different shapes exercise the
    # per-input sizing (no cross-padding) and the pad-free reshape path.
    logits_real = jax.random.normal(k1, (2, 1, 32, 32), dtype=jnp.float32)
    logits_fake = jax.random.normal(k2, (2, 1, 16, 16), dtype=jnp.float32)

    out = hinge_loss(logits_real, logits_fake)
    jax.block_until_ready(out)
    ref = _reference(logits_real, logits_fake)
    assert jnp.allclose(out, ref, atol=1e-6, rtol=1e-5), (out, ref)

    # Ragged (non multiple-of-128) sizes + skewed shapes + tiny tiles to
    # exercise multi-block accumulation, boundary masking and index clamping.
    lr2 = jax.random.normal(k3, (3, 1, 28, 28), dtype=jnp.float32)  # 2352 elems
    lf2 = jax.random.normal(k4, (2, 7, 11), dtype=jnp.float32)      # 154 elems
    out2 = hinge_loss(lr2, lf2, tile_bytes=8 * _LANES * 4)
    jax.block_until_ready(out2)
    ref2 = _reference(lr2, lf2)
    assert jnp.allclose(out2, ref2, atol=1e-6, rtol=1e-5), (out2, ref2)

    print("KERNEL_OK")
</pallas_src>

<mosaic_0001>
module attributes {stable_mosaic.version = 11 : i64} {
  func.func @_hinge_partial_sum_kernel(%arg0: i32, %arg1: i32, %arg2: memref<16x128xf32, #tpu.memory_space<vmem>>, %arg3: memref<1x8x128xf32, #tpu.memory_space<vmem>>, %arg4: memref<8x128xf32, #tpu.memory_space<vmem>>) attributes {dimension_semantics = [#tpu.dimension_semantics<parallel>, #tpu.dimension_semantics<arbitrary>], iteration_bounds = array<i64: 1, 1>, scalar_prefetch = 0 : i64, scratch_operands = 1 : i64, tpu.core_type = #tpu.core_type<tc>, window_params = [{transform_indices = @transform_0, window_bounds = array<i64: 16, 128>}, {transform_indices = @transform_1, window_bounds = array<i64: 1, 8, 128>}]} {
    %c0_i32 = arith.constant 0 : i32
    %0 = arith.cmpi eq, %arg1, %c0_i32 : i32
    %1 = arith.extui %0 : i1 to i32
    %c0_i32_0 = arith.constant 0 : i32
    %2 = arith.cmpi ne, %1, %c0_i32_0 : i32
    scf.if %2 {
      %cst_9 = arith.constant 0.000000e+00 : f32
      %19 = vector.broadcast %cst_9 : f32 to vector<8x128xf32>
      %c0_10 = arith.constant 0 : index
      %c0_11 = arith.constant 0 : index
      %20 = vector.load %arg4[%c0_10, %c0_11] : memref<8x128xf32, #tpu.memory_space<vmem>>, vector<8x128xf32>
      tpu.vector_store %arg4[%c0_10, %c0_11], %19 {strides = array<i32>} : memref<8x128xf32, #tpu.memory_space<vmem>>, vector<8x128xf32>,
    } else {
    }
    %c0 = arith.constant 0 : index
    %c0_1 = arith.constant 0 : index
    %3 = vector.load %arg2[%c0, %c0_1] : memref<16x128xf32, #tpu.memory_space<vmem>>, vector<16x128xf32>
    %cst = arith.constant 1.000000e+00 : f32
    %4 = vector.broadcast %cst : f32 to vector<16x128xf32>
    %5 = arith.subf %4, %3 : vector<16x128xf32>
    %cst_2 = arith.constant 0.000000e+00 : f32
    %6 = vector.broadcast %cst_2 : f32 to vector<16x128xf32>
    %7 = arith.maximumf %5, %6 : vector<16x128xf32>
    %c1_i32 = arith.constant 1 : i32
    %8 = arith.muli %arg0, %c1_i32 : i32
    %9 = arith.addi %8, %arg1 : i32
    %c0_i32_3 = arith.constant 0 : i32
    %10 = arith.cmpi slt, %9, %c0_i32_3 : i32
    %11 = arith.extui %10 : i1 to i32
    %c0_i32_4 = arith.constant 0 : i32
    %12 = arith.cmpi ne, %11, %c0_i32_4 : i32
    scf.if %12 {
      %c0_9 = arith.constant 0 : index
      %c0_10 = arith.constant 0 : index
      %19 = vector.load %arg4[%c0_9, %c0_10] : memref<8x128xf32, #tpu.memory_space<vmem>>, vector<8x128xf32>
      %20 = vector.shape_cast %7 : vector<16x128xf32> to vector<2x8x128xf32>
      %cst_11 = arith.constant dense<0.000000e+00> : vector<8x128xf32>
      %21 = vector.multi_reduction <add>, %20, %cst_11 [0] : vector<2x8x128xf32> to vector<8x128xf32>
      %22 = arith.addf %19, %21 : vector<8x128xf32>
      %c0_12 = arith.constant 0 : index
      %c0_13 = arith.constant 0 : index
      %23 = vector.load %arg4[%c0_12, %c0_13] : memref<8x128xf32, #tpu.memory_space<vmem>>, vector<8x128xf32>
      tpu.vector_store %arg4[%c0_12, %c0_13], %22 {strides = array<i32>} : memref<8x128xf32, #tpu.memory_space<vmem>>, vector<8x128xf32>,
    } else {
    }
    %c0_i32_5 = arith.constant 0 : i32
    %13 = arith.cmpi sge, %9, %c0_i32_5 : i32
    %14 = arith.extui %13 : i1 to i32
    %c0_i32_6 = arith.constant 0 : i32
    %15 = arith.cmpi ne, %14, %c0_i32_6 : i32
    scf.if %15 {
      %c16_i32 = arith.constant 16 : i32
      %19 = arith.muli %9, %c16_i32 : i32
      %20 = tpu.iota {dimensions = array<i32: 0>} : vector<16x128xi32>
      %21 = vector.broadcast %19 : i32 to vector<16x128xi32>
      %22 = arith.addi %21, %20 : vector<16x128xi32>
      %c16_i32_9 = arith.constant 16 : i32
      %23 = vector.broadcast %c16_i32_9 : i32 to vector<16x128xi32>
      %24 = arith.cmpi slt, %22, %23 : vector<16x128xi32>
      %cst_10 = arith.constant 0.000000e+00 : f32
      %25 = vector.broadcast %cst_10 : f32 to vector<16x128xf32>
      %26 = arith.select %24, %7, %25 : vector<16x128xi1>, vector<16x128xf32>
      %c0_11 = arith.constant 0 : index
      %c0_12 = arith.constant 0 : index
      %27 = vector.load %arg4[%c0_11, %c0_12] : memref<8x128xf32, #tpu.memory_space<vmem>>, vector<8x128xf32>
      %28 = vector.shape_cast %26 : vector<16x128xf32> to vector<2x8x128xf32>
      %cst_13 = arith.constant dense<0.000000e+00> : vector<8x128xf32>
      %29 = vector.multi_reduction <add>, %28, %cst_13 [0] : vector<2x8x128xf32> to vector<8x128xf32>
      %30 = arith.addf %27, %29 : vector<8x128xf32>
      %c0_14 = arith.constant 0 : index
      %c0_15 = arith.constant 0 : index
      %31 = vector.load %arg4[%c0_14, %c0_15] : memref<8x128xf32, #tpu.memory_space<vmem>>, vector<8x128xf32>
      tpu.vector_store %arg4[%c0_14, %c0_15], %30 {strides = array<i32>} : memref<8x128xf32, #tpu.memory_space<vmem>>, vector<8x128xf32>,
    } else {
    }
    %c0_i32_7 = arith.constant 0 : i32
    %16 = arith.cmpi eq, %arg1, %c0_i32_7 : i32
    %17 = arith.extui %16 : i1 to i32
    %c0_i32_8 = arith.constant 0 : i32
    %18 = arith.cmpi ne, %17, %c0_i32_8 : i32
    scf.if %18 {
      %c0_9 = arith.constant 0 : index
      %c0_10 = arith.constant 0 : index
      %19 = vector.load %arg4[%c0_9, %c0_10] : memref<8x128xf32, #tpu.memory_space<vmem>>, vector<8x128xf32>
      %20 = vector.shape_cast %19 : vector<8x128xf32> to vector<1x8x128xf32>
      %c0_11 = arith.constant 0 : index
      %c0_12 = arith.constant 0 : index
      %c0_13 = arith.constant 0 : index
      %21 = vector.load %arg3[%c0_11, %c0_12, %c0_13] : memref<1x8x128xf32, #tpu.memory_space<vmem>>, vector<1x8x128xf32>
      tpu.vector_store %arg3[%c0_11, %c0_12, %c0_13], %20 {strides = array<i32>} : memref<1x8x128xf32, #tpu.memory_space<vmem>>, vector<1x8x128xf32>,
    } else {
    }
    return
  }
  func.func @transform_0(%arg0: i32, %arg1: i32) -> (i32, i32) {
    %c1_i32 = arith.constant 1 : i32
    %0 = arith.muli %arg0, %c1_i32 : i32
    %1 = arith.addi %0, %arg1 : i32
    %c0_i32 = arith.constant 0 : i32
    %2 = arith.minsi %1, %c0_i32 : i32
    %c0_i32_0 = arith.constant 0 : i32
    %c0_i32_1 = arith.constant 0 : i32
    return %2, %c0_i32_0 : i32, i32
  }
  func.func @transform_1(%arg0: i32, %arg1: i32) -> (i32, i32, i32) {
    %c0_i32 = arith.constant 0 : i32
    %c0_i32_0 = arith.constant 0 : i32
    %c0_i32_1 = arith.constant 0 : i32
    return %arg0, %c0_i32, %c0_i32_0 : i32, i32, i32
  }
}

</mosaic_0001>

<llo_original>
// kernel: tpu_custom_call.1
$region0: #{tpu_custom_call.1}
  #allocation0 [shape = 'u32[]', space=smem, size = 0x4, offset = 0x4, fixed_abs, tag = 'smem constant byte address 0x4 - core index']
  #allocation1 [shape = 'u32[144,128]{1,0:T(1,128)}', space=vmem, size = 0x12000, scoped, tag = 'internal scratch']
  #allocation2 [shape = 'f32[8,128]{1,0:T(8,128)}', space=vmem, size = 0x1000, scoped, tag = 'scratch operand']
  %s0 = inlined_call_operand.hbm [shape: f32[16,128], index: 0, kind: input, shape index: {}]
  %s1 = inlined_call_operand.hbm [shape: f32[1,8,128], index: 1, kind: output, shape index: {}]
  %s2 = sld [smem:[#allocation0]]
  $region34: #{tpu_custom_call.1} parent=0
    _
  %s4 = ssub.s32 1, %s2
  %s5 = scalar_select 0, %s4, %s2
  $region1: #{tpu_custom_call.1} parent=0
    #allocation3 [shape = 'u8[8192]{0}', space=vmem, size = 0x2000, scoped, tag = 'input window, operand 0, single buffered']
    #allocation4 [shape = 's32[1]{0}', space=sflag, size = 0x4, scoped, tag = 'scoped memory for tpu_custom_call.1']
    #allocation5 [shape = 's32[1]{0}', space=sflag, size = 0x4, scoped, tag = 'scoped memory for tpu_custom_call.1']
    #allocation6 [shape = 'u8[4096]{0}', space=vmem, size = 0x1000, scoped, tag = 'output window, operand 0, single buffered']
    %6 = vsyncpa [#allocation4], 0
    %7 = vsyncpa [#allocation5], 0
    // Predicated region
    $region2: #{tpu_custom_call.1} parent=1 // pred_check
      _
    $region3: #{tpu_custom_call.1} parent=1 // pred_check_branch
      %9 = sbr.rel (0) target = $region5
    $region4: #{tpu_custom_call.1} parent=1 // pred_region
      %s10 = sadd.s32 0, 0
      %p11 = scmp.lt.s32.totalorder %s10, 0
      %s12 = scalar_select %p11, %s10, 0
      %s13 = smul.u32 2, %s12
      %s15 = ssub.s32 256, 256
      %16 = vsyncadd [#allocation4], %s15
      %s17 = smul.addr %s13, 128
      %s18 = scalar_lea.hbm %s0, %s17
      %s19 = sshll.u32 [#allocation3], 4
      %s20 = int_to_ptr.vmem [resolvable:$true] %s19
      %25 = dma.hbm_to_vmem [thread:$0]  %s18, 256, %s20, [#allocation4], 128, 128, 8
    $region5: #{tpu_custom_call.1} parent=1 // pred_fallthru
      _
    // Predicated region
    $region6: #{tpu_custom_call.1} parent=1 // pred_check
      _
    $region7: #{tpu_custom_call.1} parent=1 // pred_check_branch
      %27 = sbr.rel (0) target = $region9
    $region8: #{tpu_custom_call.1} parent=1 // pred_region
      %28 = dma.done [#allocation4], 256
    $region9: #{tpu_custom_call.1} parent=1 // pred_fallthru
      _
    %s29 = sadd.s32 0, 0
    %p30 = scmp.lt.s32.totalorder %s29, 0
    %s31 = scalar_select %p30, %s29, 0
    %s32 = smul.u32 2, %s31
    %p33 = scmp.eq.s32.totalorder 0, 0
    // Predicated region
    $region10: #{tpu_custom_call.1} parent=1 // pred_check
      %p34 = pneg %p33
    $region11: #{tpu_custom_call.1} parent=1 // pred_check_branch
      %36 = sbr.rel (%p34) target = $region13
    $region12: #{tpu_custom_call.1} parent=1 // pred_region
      %37 = vst [vmem:[#allocation2] sm:$0xff] 0.0
    $region13: #{tpu_custom_call.1} parent=1 // pred_fallthru
      _
    %v38 = vld [vmem:[#allocation3] sm:$0xff]
    %v39 = vld [vmem:[#allocation3 + $0x8] sm:$0xff]
    %v40 = vsub.f32 1.0, %v38
    %v41 = vsub.f32 1.0, %v39
    %v42 = vmax.f32 %v40, 0.0
    %v43 = vmax.f32 %v41, 0.0
    %s44 = sadd.s32 0, 0
    %p45 = scmp.lt.s32.totalorder %s44, 0
    // Predicated region
    $region14: #{tpu_custom_call.1} parent=1 // pred_check
      %p46 = pneg %p45
    $region15: #{tpu_custom_call.1} parent=1 // pred_check_branch
      %48 = sbr.rel (%p46) target = $region17
    $region16: #{tpu_custom_call.1} parent=1 // pred_region
      %v49 = vld [vmem:[#allocation2] sm:$0xff]
      %v50 = vadd.f32 %v42, %v43
      %v51 = vadd.f32 %v49, %v50
      %52 = vst [vmem:[#allocation2] sm:$0xff] %v51
    $region17: #{tpu_custom_call.1} parent=1 // pred_fallthru
      _
    %p53 = scmp.ge.s32.totalorder %s44, 0
    // Predicated region
    $region18: #{tpu_custom_call.1} parent=1 // pred_check
      %p54 = pneg %p53
    $region19: #{tpu_custom_call.1} parent=1 // pred_check_branch
      %56 = sbr.rel (%p54) target = $region21
    $region20: #{tpu_custom_call.1} parent=1 // pred_region
      %s57 = smul.u32 %s44, 16
      %v58 = vlaneseq
      %v59 = vshrl.u32 %v58, 7
      %v60 = vadd.s32 %v59, 8
      %v61 = vstv %s57
      %v62 = vadd.s32 %v61, %v59
      %v63 = vadd.s32 %v61, %v60
      %vm64 = vcmp.lt.s32.totalorder %v62, 16
      %vm65 = vcmp.lt.s32.totalorder %v63, 16
      %v66 = vsel %vm64, %v42, 0.0
      %v67 = vsel %vm65, %v43, 0.0
      %v68 = vld [vmem:[#allocation2] sm:$0xff]
      %v69 = vadd.f32 %v66, %v67
      %v70 = vadd.f32 %v68, %v69
      %71 = vst [vmem:[#allocation2] sm:$0xff] %v70
    $region21: #{tpu_custom_call.1} parent=1 // pred_fallthru
      _
    // Predicated region
    $region22: #{tpu_custom_call.1} parent=1 // pred_check
      %p72 = pneg %p33
    $region23: #{tpu_custom_call.1} parent=1 // pred_check_branch
      %74 = sbr.rel (%p72) target = $region25
    $region24: #{tpu_custom_call.1} parent=1 // pred_region
      %v75 = vld [vmem:[#allocation2] sm:$0xff]
      %76 = vst [vmem:[#allocation6] sm:$0xff] %v75
    $region25: #{tpu_custom_call.1} parent=1 // pred_fallthru
      _
    // Predicated region
    $region26: #{tpu_custom_call.1} parent=1 // pred_check
      _
    $region27: #{tpu_custom_call.1} parent=1 // pred_check_branch
      %78 = sbr.rel (0) target = $region29
    $region28: #{tpu_custom_call.1} parent=1 // pred_region
      %s80 = ssub.s32 128, 128
      %81 = vsyncadd [#allocation5], %s80
      %s83 = sshll.u32 [#allocation6], 4
      %s84 = int_to_ptr.vmem [resolvable:$true] %s83
      %86 = dma.vmem_to_hbm [thread:$0]  %s84, 128, %s1, [#allocation5]
    $region29: #{tpu_custom_call.1} parent=1 // pred_fallthru
      _
    // Predicated region
    $region30: #{tpu_custom_call.1} parent=1 // pred_check
      _
    $region31: #{tpu_custom_call.1} parent=1 // pred_check_branch
      %88 = sbr.rel (0) target = $region33
    $region32: #{tpu_custom_call.1} parent=1 // pred_region
      %89 = dma.done [#allocation5], 128
    $region33: #{tpu_custom_call.1} parent=1 // pred_fallthru
      _
    %90 = vsyncpa [#allocation4], 1
    %91 = vsyncpa [#allocation5], 1

</llo_original>
